<compile_context>
chip_gen: v6e
topology: v6e:2x2x1
jax: 0.10.0
libtpu: 0.0.40
codegen_flags: <defaults>
</compile_context>

<pallas_src>
import numpy as np

import jax
import jax.numpy as jnp
from jax.experimental import pallas as pl
from jax.experimental.pallas import tpu as pltpu


# ----------------------------------------------------------------------------
# Fused StemConv kernel
# ----------------------------------------------------------------------------
def _make_kernel(h4, w4):
    """Kernel factory (shapes are compile-time constants captured by closure)."""
    L = h4 * w4  # number of 4x4 blocks per image == number of output tokens

    def row_shift(m):
        # value at block-row (i-1); zero-fill for i == 0 (the conv zero pad).
        pad = jnp.zeros((w4, m.shape[1]), m.dtype)
        return jnp.concatenate([pad, m[:L - w4, :]], axis=0)

    def col_shift(m, keep):
        # value at block-col (j-1); rows with j == 0 are zeroed via `keep`.
        pad = jnp.zeros((1, m.shape[1]), m.dtype)
        s = jnp.concatenate([pad, m[:L - 1, :]], axis=0)
        return s * keep

    def gelu_exact(x):
        # GELU(x) = 0.5*x*(1 + erf(x/sqrt(2))); erf via Abramowitz-Stegun
        # 7.1.26 polynomial (|err| <= 1.5e-7) -- exp/mul/add only.
        z = x * 0.7071067811865476
        az = jnp.abs(z)
        t = 1.0 / (1.0 + 0.3275911 * az)
        poly = t * (0.254829592 + t * (-0.284496736 + t * (1.421413741
                    + t * (-1.453152027 + t * 1.061405429))))
        erf = 1.0 - poly * jnp.exp(-az * az)
        erf = jnp.where(z < 0, -erf, erf)
        return 0.5 * x * (1.0 + erf)

    def kernel(xp_ref, keep_ref, w1_ref, sh1_ref, w2_ref, sh2_ref, o_ref):
        # xp_ref  : (1, L, 16*Cin)        4x4 space-to-depth packed input image
        # keep_ref: (L, 1)                0.0 on rows with block-col j == 0
        # w1_ref  : (4*16*Cin, 4*Cmid)    conv1 weights, halo-shift-major rows
        # sh1_ref : (1, 4*Cmid)           folded BN1 + bias shift
        # w2_ref  : (4*4*Cmid, Cout)      conv2 weights, halo-shift-major rows
        # sh2_ref : (1, Cout)             folded BN2 + bias shift
        # o_ref   : (1, L, Cout)          output tokens (row-major over H/4 x W/4)
        keep = keep_ref[...]
        xp = xp_ref[0]

        def shifted_cat(m):
            # Lane-concat of the 4 halo-shift patterns; order must match the
            # `sig` index used when scattering weights on the host:
            # 0: none, 1: col shift, 2: row shift, 3: row+col shift.
            rs = row_shift(m)
            return jnp.concatenate(
                [m, col_shift(m, keep), rs, col_shift(rs, keep)], axis=1)

        # ---- conv1 (stride 2) + folded BN1 : one K=4*16*Cin MXU matmul ------
        h = jnp.dot(shifted_cat(xp), w1_ref[...],
                    preferred_element_type=jnp.float32)
        # h: (L, 4*Cmid) == conv1 output in 2x2 space-to-depth packed form
        h = gelu_exact(h + sh1_ref[...])

        # ---- conv2 (stride 2) + folded BN2 on the VMEM-resident intermediate
        out = jnp.dot(shifted_cat(h), w2_ref[...],
                      preferred_element_type=jnp.float32)
        # (L, Cout) rows are already in PyTorch's flatten(2).transpose(1,2) order
        o_ref[0] = (out + sh2_ref[...]).astype(o_ref.dtype)

    return kernel


def stem_conv_forward(x_nhwc, params):
    """StemConv forward.  x_nhwc: (N, H, W, Cin) float32.

    Returns (tokens, H//4, W//4) with tokens: (N, (H//4)*(W//4), Cout),
    matching PyTorch's `x.flatten(2).transpose(1, 2)` token ordering.
    """
    N, H, W, Cin = x_nhwc.shape
    assert H % 4 == 0 and W % 4 == 0, "fused StemConv assumes H, W divisible by 4"
    Cmid = params["sh1"].shape[1] // 4
    Cout = params["sh2"].shape[1]
    H4, W4 = H // 4, W // 4
    L = H4 * W4

    # 4x4 space-to-depth: a single transpose of the input (layout plumbing),
    # giving a lane-dense (L, 16*Cin) slab per image and removing every
    # per-conv pad / HBM round trip.
    xp = (x_nhwc.reshape(N, H4, 4, W4, 4, Cin)
          .transpose(0, 1, 3, 2, 4, 5)
          .reshape(N, L, 16 * Cin))
    keep = jnp.asarray((np.arange(L) % W4 != 0)
                       .astype(np.float32).reshape(L, 1))

    kernel = _make_kernel(H4, W4)
    tokens = pl.pallas_call(
        kernel,
        out_shape=jax.ShapeDtypeStruct((N, L, Cout), x_nhwc.dtype),
        grid=(N,),
        in_specs=[
            pl.BlockSpec((1, L, 16 * Cin), lambda n: (n, 0, 0)),
            pl.BlockSpec((L, 1), lambda n: (0, 0)),
            pl.BlockSpec((4 * 16 * Cin, 4 * Cmid), lambda n: (0, 0)),
            pl.BlockSpec((1, 4 * Cmid), lambda n: (0, 0)),
            pl.BlockSpec((4 * 4 * Cmid, Cout), lambda n: (0, 0)),
            pl.BlockSpec((1, Cout), lambda n: (0, 0)),
        ],
        out_specs=pl.BlockSpec((1, L, Cout), lambda n: (n, 0, 0)),
        compiler_params=pltpu.CompilerParams(
            dimension_semantics=("parallel",),
            vmem_limit_bytes=32 * 1024 * 1024,
        ),
    )(xp, keep, params["w1c"], params["sh1"], params["w2c"], params["sh2"])
    # TODO(synk): for production-size feature maps, add a block-row grid axis
    # over L (with a one-block-row halo for the row shifts) so each tile stays
    # within v7x's 32 MiB scoped-VMEM default instead of one whole image.
    return tokens, H4, W4


# ----------------------------------------------------------------------------
# Parameter construction: fold conv bias + eval-mode BN, scatter weights into
# the "halo-shift-major" concatenated matrices consumed by the kernel.
# (Host-side glue, done once.)
# ----------------------------------------------------------------------------
def build_stem_params(w1, b1, g1, be1, m1, v1,
                      w2, b2, g2, be2, m2, v2, eps=1e-5):
    """w1: (3,3,Cin,Cmid) HWIO, w2: (3,3,Cmid,Cout) HWIO; BN params per layer."""
    w1 = np.asarray(w1, np.float32)
    w2 = np.asarray(w2, np.float32)
    b1, b2 = np.asarray(b1, np.float32), np.asarray(b2, np.float32)
    g1, g2 = np.asarray(g1, np.float32), np.asarray(g2, np.float32)
    be1, be2 = np.asarray(be1, np.float32), np.asarray(be2, np.float32)
    m1, m2 = np.asarray(m1, np.float32), np.asarray(m2, np.float32)
    v1, v2 = np.asarray(v1, np.float32), np.asarray(v2, np.float32)

    Cin, Cmid = w1.shape[2], w1.shape[3]
    Cout = w2.shape[3]
    assert w2.shape[2] == Cmid

    s1 = g1 / np.sqrt(v1 + eps)
    sh1 = (b1 - m1) * s1 + be1
    s2 = g2 / np.sqrt(v2 + eps)
    sh2 = (b2 - m2) * s2 + be2
    w1e = w1 * s1[None, None, None, :]     # BN scale folded into conv weights
    w2e = w2 * s2[None, None, None, :]

    # conv1: input lanes = (rp*4+sp)*Cin + c  (4x4 phase packed x),
    #        output lanes = (a*2+b)*Cmid + o  (2x2 phase packed h).
    # Output phase (a,b), tap (u,v) reads source phase ((2a+u-1)%4, (2b+v-1)%4)
    # with a block-row / block-col halo shift iff 2a+u-1 < 0 / 2b+v-1 < 0.
    w1s = np.zeros((4, 16 * Cin, 4 * Cmid), np.float32)
    for a in range(2):
        for b in range(2):
            for u in range(3):
                for v in range(3):
                    r, s = 2 * a + u - 1, 2 * b + v - 1
                    sig = 2 * int(r < 0) + int(s < 0)
                    src = ((r % 4) * 4 + (s % 4)) * Cin
                    dst = (a * 2 + b) * Cmid
                    w1s[sig, src:src + Cin, dst:dst + Cmid] = w1e[u, v]

    # conv2: input lanes = (a'*2+b')*Cmid + cm (2x2 phase packed h),
    #        output lanes = Cout.  Tap (u,v) reads phase ((u-1)%2, (v-1)%2)
    # with a halo shift iff u == 0 / v == 0.
    w2s = np.zeros((4, 4 * Cmid, Cout), np.float32)
    for u in range(3):
        for v in range(3):
            ap, bp = (u - 1) % 2, (v - 1) % 2
            sig = 2 * int(u == 0) + int(v == 0)
            src = (ap * 2 + bp) * Cmid
            w2s[sig, src:src + Cmid, :] = w2e[u, v]

    # Halo-shift-major concatenation: row index = sig*K + k, matching the
    # in-kernel lane concat [none, col, row, row+col]  ->  ONE matmul per conv.
    w1c = w1s.reshape(4 * 16 * Cin, 4 * Cmid)
    w2c = w2s.reshape(4 * 4 * Cmid, Cout)

    return {
        "w1c": jnp.asarray(w1c),
        "sh1": jnp.asarray(np.tile(sh1, 4).reshape(1, 4 * Cmid)),
        "w2c": jnp.asarray(w2c),
        "sh2": jnp.asarray(sh2.reshape(1, Cout)),
    }


# ----------------------------------------------------------------------------
# Pure-JAX reference (mirrors the PyTorch module; verification only)
# ----------------------------------------------------------------------------
def _stem_conv_ref(x, w1, b1, g1, be1, m1, v1,
                   w2, b2, g2, be2, m2, v2, eps=1e-5):
    def conv(z, w, b):
        y = jax.lax.conv_general_dilated(
            z, w, window_strides=(2, 2), padding=((1, 1), (1, 1)),
            dimension_numbers=("NHWC", "HWIO", "NHWC"),
            precision=jax.lax.Precision.HIGHEST)
        return y + b

    def bn(z, g, be, m, v):
        return (z - m) * (g / jnp.sqrt(v + eps)) + be

    h = bn(conv(x, w1, b1), g1, be1, m1, v1)
    h = jax.nn.gelu(h, approximate=False)           # nn.GELU() default = exact
    y = bn(conv(h, w2, b2), g2, be2, m2, v2)
    N, Ho, Wo, C = y.shape
    return y.reshape(N, Ho * Wo, C), Ho, Wo


# ----------------------------------------------------------------------------
if __name__ == "__main__":
    # PyTorch-equivalent input: x of shape (2, 4, 16, 16) NCHW,
    # StemConv(in_channels=4, out_channels=32).
    N, Cin, H, W = 2, 4, 16, 16
    Cout = 32
    Cmid = Cout // 2

    key = jax.random.PRNGKey(0)
    ks = jax.random.split(key, 13)

    w1 = (0.2 * jax.random.normal(ks[0], (3, 3, Cin, Cmid))).astype(jnp.float32)
    b1 = (0.1 * jax.random.normal(ks[1], (Cmid,))).astype(jnp.float32)
    g1 = (1.0 + 0.1 * jax.random.normal(ks[2], (Cmid,))).astype(jnp.float32)
    be1 = (0.1 * jax.random.normal(ks[3], (Cmid,))).astype(jnp.float32)
    m1 = (0.1 * jax.random.normal(ks[4], (Cmid,))).astype(jnp.float32)
    v1 = (0.5 + jax.random.uniform(ks[5], (Cmid,))).astype(jnp.float32)

    w2 = (0.2 * jax.random.normal(ks[6], (3, 3, Cmid, Cout))).astype(jnp.float32)
    b2 = (0.1 * jax.random.normal(ks[7], (Cout,))).astype(jnp.float32)
    g2 = (1.0 + 0.1 * jax.random.normal(ks[8], (Cout,))).astype(jnp.float32)
    be2 = (0.1 * jax.random.normal(ks[9], (Cout,))).astype(jnp.float32)
    m2 = (0.1 * jax.random.normal(ks[10], (Cout,))).astype(jnp.float32)
    v2 = (0.5 + jax.random.uniform(ks[11], (Cout,))).astype(jnp.float32)

    # Activations in NHWC (channels -> TPU lanes); pure layout glue vs NCHW.
    x = jax.random.normal(ks[12], (N, H, W, Cin), dtype=jnp.float32)

    params = build_stem_params(w1, b1, g1, be1, m1, v1,
                               w2, b2, g2, be2, m2, v2)

    tokens, Ho, Wo = stem_conv_forward(x, params)
    tokens = jax.block_until_ready(tokens)
    assert tokens.shape == (N, (H // 4) * (W // 4), Cout), tokens.shape
    assert (Ho, Wo) == (H // 4, W // 4)

    ref, rHo, rWo = _stem_conv_ref(x, w1, b1, g1, be1, m1, v1,
                                   w2, b2, g2, be2, m2, v2)
    ref = jax.block_until_ready(ref)
    assert (rHo, rWo) == (Ho, Wo)
    np.testing.assert_allclose(np.asarray(tokens), np.asarray(ref),
                               rtol=1e-3, atol=1e-3)

    print("KERNEL_OK")
</pallas_src>

<mosaic_0001>
module attributes {stable_mosaic.version = 11 : i64} {
  func.func @kernel(%arg0: i32, %arg1: memref<1x16x64xf32, #tpu.memory_space<vmem>>, %arg2: memref<16x1xf32, #tpu.memory_space<vmem>>, %arg3: memref<256x64xf32, #tpu.memory_space<vmem>>, %arg4: memref<1x64xf32, #tpu.memory_space<vmem>>, %arg5: memref<256x32xf32, #tpu.memory_space<vmem>>, %arg6: memref<1x32xf32, #tpu.memory_space<vmem>>, %arg7: memref<1x16x32xf32, #tpu.memory_space<vmem>>) attributes {dimension_semantics = [#tpu.dimension_semantics<parallel>], iteration_bounds = array<i64: 2>, scalar_prefetch = 0 : i64, scratch_operands = 0 : i64, tpu.core_type = #tpu.core_type<tc>, window_params = [{transform_indices = @transform_0, window_bounds = array<i64: 1, 16, 64>}, {pipeline_mode = #tpu.pipeline_mode<synchronous>, transform_indices = @transform_1, window_bounds = array<i64: 16, 1>}, {pipeline_mode = #tpu.pipeline_mode<synchronous>, transform_indices = @transform_2, window_bounds = array<i64: 256, 64>}, {pipeline_mode = #tpu.pipeline_mode<synchronous>, transform_indices = @transform_3, window_bounds = array<i64: 1, 64>}, {pipeline_mode = #tpu.pipeline_mode<synchronous>, transform_indices = @transform_4, window_bounds = array<i64: 256, 32>}, {pipeline_mode = #tpu.pipeline_mode<synchronous>, transform_indices = @transform_5, window_bounds = array<i64: 1, 32>}, {transform_indices = @transform_6, window_bounds = array<i64: 1, 16, 32>}]} {
    %c0 = arith.constant 0 : index
    %c0_0 = arith.constant 0 : index
    %0 = vector.load %arg2[%c0, %c0_0] : memref<16x1xf32, #tpu.memory_space<vmem>>, vector<16x1xf32>
    %c0_1 = arith.constant 0 : index
    %c0_2 = arith.constant 0 : index
    %c0_3 = arith.constant 0 : index
    %1 = vector.load %arg1[%c0_1, %c0_2, %c0_3] : memref<1x16x64xf32, #tpu.memory_space<vmem>>, vector<1x16x64xf32>
    %2 = vector.shape_cast %1 : vector<1x16x64xf32> to vector<16x64xf32>
    %cst = arith.constant 0.000000e+00 : f32
    %3 = vector.broadcast %cst : f32 to vector<4x64xf32>
    %4 = vector.extract_strided_slice %2 {offsets = [0, 0], sizes = [12, 64], strides = [1, 1]} : vector<16x64xf32> to vector<12x64xf32>
    %5 = tpu.concatenate %3, %4 in 0 : vector<4x64xf32>, vector<12x64xf32> -> vector<16x64xf32>
    %cst_4 = arith.constant 0.000000e+00 : f32
    %6 = vector.broadcast %cst_4 : f32 to vector<1x64xf32>
    %7 = vector.extract_strided_slice %2 {offsets = [0, 0], sizes = [15, 64], strides = [1, 1]} : vector<16x64xf32> to vector<15x64xf32>
    %8 = tpu.concatenate %6, %7 in 0 : vector<1x64xf32>, vector<15x64xf32> -> vector<16x64xf32>
    %9 = vector.broadcast %0 : vector<16x1xf32> to vector<16x64xf32>
    %10 = arith.mulf %8, %9 : vector<16x64xf32>
    %cst_5 = arith.constant 0.000000e+00 : f32
    %11 = vector.broadcast %cst_5 : f32 to vector<1x64xf32>
    %12 = vector.extract_strided_slice %5 {offsets = [0, 0], sizes = [15, 64], strides = [1, 1]} : vector<16x64xf32> to vector<15x64xf32>
    %13 = tpu.concatenate %11, %12 in 0 : vector<1x64xf32>, vector<15x64xf32> -> vector<16x64xf32>
    %14 = vector.broadcast %0 : vector<16x1xf32> to vector<16x64xf32>
    %15 = arith.mulf %13, %14 : vector<16x64xf32>
    %16 = tpu.concatenate %2, %10, %5, %15 in 1 : vector<16x64xf32>, vector<16x64xf32>, vector<16x64xf32>, vector<16x64xf32> -> vector<16x256xf32>
    %c0_6 = arith.constant 0 : index
    %c0_7 = arith.constant 0 : index
    %17 = vector.load %arg3[%c0_6, %c0_7] : memref<256x64xf32, #tpu.memory_space<vmem>>, vector<256x64xf32>
    %cst_8 = arith.constant dense<0.000000e+00> : vector<16x64xf32>
    %18 = tpu.matmul %16, %17, %cst_8 {dimension_numbers = #tpu.dot_dimension_numbers<[1], [0], [0], [1], [0, 0, 1, 1], [], []>} : vector<16x256xf32>, vector<256x64xf32>, vector<16x64xf32> -> vector<16x64xf32>
    %c0_9 = arith.constant 0 : index
    %c0_10 = arith.constant 0 : index
    %19 = vector.load %arg4[%c0_9, %c0_10] : memref<1x64xf32, #tpu.memory_space<vmem>>, vector<1x64xf32>
    %20 = vector.broadcast %19 : vector<1x64xf32> to vector<16x64xf32>
    %21 = arith.addf %18, %20 : vector<16x64xf32>
    %cst_11 = arith.constant 0.707106769 : f32
    %22 = vector.broadcast %cst_11 : f32 to vector<16x64xf32>
    %23 = arith.mulf %21, %22 : vector<16x64xf32>
    %24 = math.absf %23 : vector<16x64xf32>
    %cst_12 = arith.constant 0.327591091 : f32
    %25 = vector.broadcast %cst_12 : f32 to vector<16x64xf32>
    %26 = arith.mulf %25, %24 : vector<16x64xf32>
    %cst_13 = arith.constant 1.000000e+00 : f32
    %27 = vector.broadcast %cst_13 : f32 to vector<16x64xf32>
    %28 = arith.addf %27, %26 : vector<16x64xf32>
    %cst_14 = arith.constant 1.000000e+00 : f32
    %29 = vector.broadcast %cst_14 : f32 to vector<16x64xf32>
    %30 = arith.divf %29, %28 : vector<16x64xf32>
    %cst_15 = arith.constant 1.06140542 : f32
    %31 = vector.broadcast %cst_15 : f32 to vector<16x64xf32>
    %32 = arith.mulf %30, %31 : vector<16x64xf32>
    %cst_16 = arith.constant -1.45315206 : f32
    %33 = vector.broadcast %cst_16 : f32 to vector<16x64xf32>
    %34 = arith.addf %33, %32 : vector<16x64xf32>
    %35 = arith.mulf %30, %34 : vector<16x64xf32>
    %cst_17 = arith.constant 1.42141378 : f32
    %36 = vector.broadcast %cst_17 : f32 to vector<16x64xf32>
    %37 = arith.addf %36, %35 : vector<16x64xf32>
    %38 = arith.mulf %30, %37 : vector<16x64xf32>
    %cst_18 = arith.constant -0.284496725 : f32
    %39 = vector.broadcast %cst_18 : f32 to vector<16x64xf32>
    %40 = arith.addf %39, %38 : vector<16x64xf32>
    %41 = arith.mulf %30, %40 : vector<16x64xf32>
    %cst_19 = arith.constant 0.254829586 : f32
    %42 = vector.broadcast %cst_19 : f32 to vector<16x64xf32>
    %43 = arith.addf %42, %41 : vector<16x64xf32>
    %44 = arith.mulf %30, %43 : vector<16x64xf32>
    %cst_20 = arith.constant 0.000000e+00 : f32
    %45 = vector.broadcast %cst_20 : f32 to vector<16x64xf32>
    %46 = arith.subf %45, %24 : vector<16x64xf32>
    %47 = arith.mulf %46, %24 : vector<16x64xf32>
    %48 = math.exp %47 : vector<16x64xf32>
    %49 = arith.mulf %44, %48 : vector<16x64xf32>
    %cst_21 = arith.constant 1.000000e+00 : f32
    %50 = vector.broadcast %cst_21 : f32 to vector<16x64xf32>
    %51 = arith.subf %50, %49 : vector<16x64xf32>
    %cst_22 = arith.constant 0.000000e+00 : f32
    %52 = vector.broadcast %cst_22 : f32 to vector<16x64xf32>
    %53 = arith.cmpf olt, %23, %52 : vector<16x64xf32>
    %cst_23 = arith.constant 0.000000e+00 : f32
    %54 = vector.broadcast %cst_23 : f32 to vector<16x64xf32>
    %55 = arith.subf %54, %51 : vector<16x64xf32>
    %56 = arith.select %53, %55, %51 : vector<16x64xi1>, vector<16x64xf32>
    %cst_24 = arith.constant 5.000000e-01 : f32
    %57 = vector.broadcast %cst_24 : f32 to vector<16x64xf32>
    %58 = arith.mulf %57, %21 : vector<16x64xf32>
    %cst_25 = arith.constant 1.000000e+00 : f32
    %59 = vector.broadcast %cst_25 : f32 to vector<16x64xf32>
    %60 = arith.addf %59, %56 : vector<16x64xf32>
    %61 = arith.mulf %58, %60 : vector<16x64xf32>
    %cst_26 = arith.constant 0.000000e+00 : f32
    %62 = vector.broadcast %cst_26 : f32 to vector<4x64xf32>
    %63 = vector.extract_strided_slice %61 {offsets = [0, 0], sizes = [12, 64], strides = [1, 1]} : vector<16x64xf32> to vector<12x64xf32>
    %64 = tpu.concatenate %62, %63 in 0 : vector<4x64xf32>, vector<12x64xf32> -> vector<16x64xf32>
    %cst_27 = arith.constant 0.000000e+00 : f32
    %65 = vector.broadcast %cst_27 : f32 to vector<1x64xf32>
    %66 = vector.extract_strided_slice %61 {offsets = [0, 0], sizes = [15, 64], strides = [1, 1]} : vector<16x64xf32> to vector<15x64xf32>
    %67 = tpu.concatenate %65, %66 in 0 : vector<1x64xf32>, vector<15x64xf32> -> vector<16x64xf32>
    %68 = vector.broadcast %0 : vector<16x1xf32> to vector<16x64xf32>
    %69 = arith.mulf %67, %68 : vector<16x64xf32>
    %cst_28 = arith.constant 0.000000e+00 : f32
    %70 = vector.broadcast %cst_28 : f32 to vector<1x64xf32>
    %71 = vector.extract_strided_slice %64 {offsets = [0, 0], sizes = [15, 64], strides = [1, 1]} : vector<16x64xf32> to vector<15x64xf32>
    %72 = tpu.concatenate %70, %71 in 0 : vector<1x64xf32>, vector<15x64xf32> -> vector<16x64xf32>
    %73 = vector.broadcast %0 : vector<16x1xf32> to vector<16x64xf32>
    %74 = arith.mulf %72, %73 : vector<16x64xf32>
    %75 = tpu.concatenate %61, %69, %64, %74 in 1 : vector<16x64xf32>, vector<16x64xf32>, vector<16x64xf32>, vector<16x64xf32> -> vector<16x256xf32>
    %c0_29 = arith.constant 0 : index
    %c0_30 = arith.constant 0 : index
    %76 = vector.load %arg5[%c0_29, %c0_30] : memref<256x32xf32, #tpu.memory_space<vmem>>, vector<256x32xf32>
    %cst_31 = arith.constant dense<0.000000e+00> : vector<16x32xf32>
    %77 = tpu.matmul %75, %76, %cst_31 {dimension_numbers = #tpu.dot_dimension_numbers<[1], [0], [0], [1], [0, 0, 1, 1], [], []>} : vector<16x256xf32>, vector<256x32xf32>, vector<16x32xf32> -> vector<16x32xf32>
    %c0_32 = arith.constant 0 : index
    %c0_33 = arith.constant 0 : index
    %78 = vector.load %arg6[%c0_32, %c0_33] : memref<1x32xf32, #tpu.memory_space<vmem>>, vector<1x32xf32>
    %79 = vector.broadcast %78 : vector<1x32xf32> to vector<16x32xf32>
    %80 = arith.addf %77, %79 : vector<16x32xf32>
    %c0_34 = arith.constant 0 : index
    %c0_35 = arith.constant 0 : index
    %c0_36 = arith.constant 0 : index
    %81 = vector.load %arg7[%c0_34, %c0_35, %c0_36] : memref<1x16x32xf32, #tpu.memory_space<vmem>>, vector<1x16x32xf32>
    %82 = vector.shape_cast %81 : vector<1x16x32xf32> to vector<16x32xf32>
    %83 = vector.shape_cast %80 : vector<16x32xf32> to vector<1x16x32xf32>
    tpu.vector_store %arg7[%c0_34, %c0_35, %c0_36], %83 {strides = array<i32>} : memref<1x16x32xf32, #tpu.memory_space<vmem>>, vector<1x16x32xf32>,
    return
  }
  func.func @transform_0(%arg0: i32) -> (i32, i32, i32) {
    %c0_i32 = arith.constant 0 : i32
    %c0_i32_0 = arith.constant 0 : i32
    %c0_i32_1 = arith.constant 0 : i32
    return %arg0, %c0_i32, %c0_i32_0 : i32, i32, i32
  }
  func.func @transform_1(%arg0: i32) -> (i32, i32) {
    %c0_i32 = arith.constant 0 : i32
    %c0_i32_0 = arith.constant 0 : i32
    %c0_i32_1 = arith.constant 0 : i32
    return %c0_i32, %c0_i32_0 : i32, i32
  }
  func.func @transform_2(%arg0: i32) -> (i32, i32) {
    %c0_i32 = arith.constant 0 : i32
    %c0_i32_0 = arith.constant 0 : i32
    %c0_i32_1 = arith.constant 0 : i32
    return %c0_i32, %c0_i32_0 : i32, i32
  }
  func.func @transform_3(%arg0: i32) -> (i32, i32) {
    %c0_i32 = arith.constant 0 : i32
    %c0_i32_0 = arith.constant 0 : i32
    %c0_i32_1 = arith.constant 0 : i32
    return %c0_i32, %c0_i32_0 : i32, i32
  }
  func.func @transform_4(%arg0: i32) -> (i32, i32) {
    %c0_i32 = arith.constant 0 : i32
    %c0_i32_0 = arith.constant 0 : i32
    %c0_i32_1 = arith.constant 0 : i32
    return %c0_i32, %c0_i32_0 : i32, i32
  }
  func.func @transform_5(%arg0: i32) -> (i32, i32) {
    %c0_i32 = arith.constant 0 : i32
    %c0_i32_0 = arith.constant 0 : i32
    %c0_i32_1 = arith.constant 0 : i32
    return %c0_i32, %c0_i32_0 : i32, i32
  }
  func.func @transform_6(%arg0: i32) -> (i32, i32, i32) {
    %c0_i32 = arith.constant 0 : i32
    %c0_i32_0 = arith.constant 0 : i32
    %c0_i32_1 = arith.constant 0 : i32
    return %arg0, %c0_i32, %c0_i32_0 : i32, i32, i32
  }
}

</mosaic_0001>

<llo_original>
// kernel: tpu_custom_call.1
$region0: #{tpu_custom_call.1}
  #allocation0 [shape = 'u32[]', space=smem, size = 0x4, offset = 0x4, fixed_abs, tag = 'smem constant byte address 0x4 - core index']
  #allocation1 [shape = 'u32[144,128]{1,0:T(1,128)}', space=vmem, size = 0x12000, scoped, tag = 'internal scratch']
  %s0 = inlined_call_operand.vmem [shape: f32[2,16,64], index: 0, kind: input, shape index: {}]
  %s1 = inlined_call_operand.vmem [shape: f32[16,1], index: 1, kind: input, shape index: {}]
  %s2 = inlined_call_operand.vmem [shape: f32[256,64], index: 2, kind: input, shape index: {}]
  %s3 = inlined_call_operand.vmem [shape: f32[1,64], index: 3, kind: input, shape index: {}]
  %s4 = inlined_call_operand.vmem [shape: f32[256,32], index: 4, kind: input, shape index: {}]
  %s5 = inlined_call_operand.vmem [shape: f32[1,32], index: 5, kind: input, shape index: {}]
  %s6 = inlined_call_operand.hbm [shape: f32[2,16,32], index: 6, kind: output, shape index: {}]
  %s7 = sld [smem:[#allocation0]]
  $region57: #{tpu_custom_call.1} parent=0
    _
  %s9 = ssub.s32 1, %s7
  %s10 = scalar_select 0, %s9, %s7
  $region1: #{tpu_custom_call.1} parent=0
    #allocation2 [shape = 'u8[16384]{0}', space=vmem, size = 0x4000, scoped, tag = 'output window, operand 0']
    #allocation3 [shape = 's32[2]{0}', space=sflag, size = 0x8, scoped, tag = 'scoped memory for tpu_custom_call.1']
    %11 = vsyncpa [#allocation3], 0
    %s12 = scalar_lea.sflag [#allocation3], 1
    %13 = vsyncpa %s12, 0
    loop: start=0, step=1, limit=4
    $region2: #{tpu_custom_call.1} parent=1 // loop_pre_header
      _
    $region3: #{tpu_custom_call.1} parent=1 // loop_header
      %s15 = sphi 0, %s19
      %p16 = scmp.ge.s32.totalorder %s15, 4
      %s25 = sphi 0, %s27
      %s28 = sphi 0, %s25
      %s29 = sphi 0, %s28
      %s45 = sphi 0, %s29
      %s49 = sphi 0, %s49
      %s51 = sphi 0, %s49
      %s52 = sphi 0, %s51
      %s66 = sphi 0, %s52
      %s70 = sphi 0, %s70
      %s72 = sphi 0, %s70
      %s73 = sphi 0, %s72
      %s87 = sphi 0, %s73
      %s91 = sphi 0, %s91
      %s93 = sphi 0, %s91
      %s94 = sphi 0, %s93
      %s108 = sphi 0, %s94
      %s112 = sphi 0, %s112
      %s114 = sphi 0, %s112
      %s115 = sphi 0, %s114
      %s129 = sphi 0, %s115
      %s133 = sphi 0, %s133
      %s135 = sphi 0, %s133
      %s136 = sphi 0, %s135
      %s150 = sphi 0, %s136
      %s156 = sphi 0, %s158
      %s159 = sphi 0, %s156
      %s160 = sphi 0, %s159
      %s176 = sphi 0, %s160
    $region4: #{tpu_custom_call.1} parent=1 // loop_header_branch
      %18 = sbr.rel (%p16) target = $region8
    $region5: #{tpu_custom_call.1} parent=1 // loop_body
      %s20 = ssub.s32 %s15, 1
      %s21 = ssub.s32 %s15, 2
      %s22 = sadd.s32 %s15, 1
      %s23 = ssub.s32 %s15, %s22
      %p24 = scmp.eq.s32.totalorder %s23, 0
      %s26 = sadd.s32 %s25, 1
      %s27 = scalar_select %p24, %s25, %s26
      %p30 = pneg %p24
      %p31 = scmp.eq.s32.totalorder %s15, 1
      %p32 = por %p30, %p31
      %p33 = scmp.ne.s32.totalorder %s25, %s28
      %p34 = scmp.eq.s32.totalorder %s15, 0
      %p35 = por %p33, %p34
      %p36 = scmp.ne.s32.totalorder %s25, %s28
      %p37 = scmp.eq.s32.totalorder %s20, 1
      %p38 = por %p36, %p37
      %p39 = scmp.ne.s32.totalorder %s28, %s29
      %p40 = scmp.eq.s32.totalorder %s20, 0
      %p41 = por %p39, %p40
      %p42 = scmp.ne.s32.totalorder %s28, %s29
      %p43 = scmp.eq.s32.totalorder %s21, 1
      %p44 = por %p42, %p43
      %p46 = scmp.ne.s32.totalorder %s29, %s45
      %p47 = scmp.eq.s32.totalorder %s21, 0
      %p48 = por %p46, %p47
      %s50 = sadd.s32 %s49, 1
      %p53 = scmp.eq.s32.totalorder %s15, 1
      %p54 = scmp.ne.s32.totalorder %s49, %s51
      %p55 = scmp.eq.s32.totalorder %s15, 0
      %p56 = por %p54, %p55
      %p57 = scmp.ne.s32.totalorder %s49, %s51
      %p58 = scmp.eq.s32.totalorder %s20, 1
      %p59 = por %p57, %p58
      %p60 = scmp.ne.s32.totalorder %s51, %s52
      %p61 = scmp.eq.s32.totalorder %s20, 0
      %p62 = por %p60, %p61
      %p63 = scmp.ne.s32.totalorder %s51, %s52
      %p64 = scmp.eq.s32.totalorder %s21, 1
      %p65 = por %p63, %p64
      %p67 = scmp.ne.s32.totalorder %s52, %s66
      %p68 = scmp.eq.s32.totalorder %s21, 0
      %p69 = por %p67, %p68
      %s71 = sadd.s32 %s70, 1
      %p74 = scmp.eq.s32.totalorder %s15, 1
      %p75 = scmp.ne.s32.totalorder %s70, %s72
      %p76 = scmp.eq.s32.totalorder %s15, 0
      %p77 = por %p75, %p76
      %p78 = scmp.ne.s32.totalorder %s70, %s72
      %p79 = scmp.eq.s32.totalorder %s20, 1
      %p80 = por %p78, %p79
      %p81 = scmp.ne.s32.totalorder %s72, %s73
      %p82 = scmp.eq.s32.totalorder %s20, 0
      %p83 = por %p81, %p82
      %p84 = scmp.ne.s32.totalorder %s72, %s73
      %p85 = scmp.eq.s32.totalorder %s21, 1
      %p86 = por %p84, %p85
      %p88 = scmp.ne.s32.totalorder %s73, %s87
      %p89 = scmp.eq.s32.totalorder %s21, 0
      %p90 = por %p88, %p89
      %s92 = sadd.s32 %s91, 1
      %p95 = scmp.eq.s32.totalorder %s15, 1
      %p96 = scmp.ne.s32.totalorder %s91, %s93
      %p97 = scmp.eq.s32.totalorder %s15, 0
      %p98 = por %p96, %p97
      %p99 = scmp.ne.s32.totalorder %s91, %s93
      %p100 = scmp.eq.s32.totalorder %s20, 1
      %p101 = por %p99, %p100
      %p102 = scmp.ne.s32.totalorder %s93, %s94
      %p103 = scmp.eq.s32.totalorder %s20, 0
      %p104 = por %p102, %p103
      %p105 = scmp.ne.s32.totalorder %s93, %s94
      %p106 = scmp.eq.s32.totalorder %s21, 1
      %p107 = por %p105, %p106
      %p109 = scmp.ne.s32.totalorder %s94, %s108
      %p110 = scmp.eq.s32.totalorder %s21, 0
      %p111 = por %p109, %p110
      %s113 = sadd.s32 %s112, 1
      %p116 = scmp.eq.s32.totalorder %s15, 1
      %p117 = scmp.ne.s32.totalorder %s112, %s114
      %p118 = scmp.eq.s32.totalorder %s15, 0
      %p119 = por %p117, %p118
      %p120 = scmp.ne.s32.totalorder %s112, %s114
      %p121 = scmp.eq.s32.totalorder %s20, 1
      %p122 = por %p120, %p121
      %p123 = scmp.ne.s32.totalorder %s114, %s115
      %p124 = scmp.eq.s32.totalorder %s20, 0
      %p125 = por %p123, %p124
      %p126 = scmp.ne.s32.totalorder %s114, %s115
      %p127 = scmp.eq.s32.totalorder %s21, 1
      %p128 = por %p126, %p127
      %p130 = scmp.ne.s32.totalorder %s115, %s129
      %p131 = scmp.eq.s32.totalorder %s21, 0
      %p132 = por %p130, %p131
      %s134 = sadd.s32 %s133, 1
      %p137 = scmp.eq.s32.totalorder %s15, 1
      %p138 = scmp.ne.s32.totalorder %s133, %s135
      %p139 = scmp.eq.s32.totalorder %s15, 0
      %p140 = por %p138, %p139
      %p141 = scmp.ne.s32.totalorder %s133, %s135
      %p142 = scmp.eq.s32.totalorder %s20, 1
      %p143 = por %p141, %p142
      %p144 = scmp.ne.s32.totalorder %s135, %s136
      %p145 = scmp.eq.s32.totalorder %s20, 0
      %p146 = por %p144, %p145
      %p147 = scmp.ne.s32.totalorder %s135, %s136
      %p148 = scmp.eq.s32.totalorder %s21, 1
      %p149 = por %p147, %p148
      %p151 = scmp.ne.s32.totalorder %s136, %s150
      %p152 = scmp.eq.s32.totalorder %s21, 0
      %p153 = por %p151, %p152
      %s154 = ssub.s32 %s15, %s22
      %p155 = scmp.eq.s32.totalorder %s154, 0
      %s157 = sadd.s32 %s156, 1
      %s158 = scalar_select %p155, %s156, %s157
      %p161 = pneg %p155
      %p162 = scmp.eq.s32.totalorder %s15, 1
      %p163 = por %p161, %p162
      %p164 = scmp.ne.s32.totalorder %s156, %s159
      %p165 = scmp.eq.s32.totalorder %s15, 0
      %p166 = por %p164, %p165
      %p167 = scmp.ne.s32.totalorder %s156, %s159
      %p168 = scmp.eq.s32.totalorder %s20, 1
      %p169 = por %p167, %p168
      %p170 = scmp.ne.s32.totalorder %s159, %s160
      %p171 = scmp.eq.s32.totalorder %s20, 0
      %p172 = por %p170, %p171
      %p173 = scmp.ne.s32.totalorder %s159, %s160
      %p174 = scmp.eq.s32.totalorder %s21, 1
      %p175 = por %p173, %p174
      %p177 = scmp.ne.s32.totalorder %s160, %s176
      %p178 = scmp.eq.s32.totalorder %s21, 0
      %p179 = por %p177, %p178
      %p180 = scmp.le.s32.totalorder 1, %s15
      %p181 = scmp.lt.s32.totalorder %s15, 3
      %p182 = pnand %p180, %p181
      %p183 = pneg %p182
      // Predicated region
      $region9: #{tpu_custom_call.1} parent=5 // pred_check
        _
      $region10: #{tpu_custom_call.1} parent=5 // pred_check_branch
        %185 = sbr.rel (%p182) target = $region12
      $region11: #{tpu_custom_call.1} parent=5 // pred_region
        %s186 = ssub.s32 %s15, 1
        // Predicated region
        $region13: #{tpu_custom_call.1} parent=11 // pred_check
          %p187 = pneg %p62
        $region14: #{tpu_custom_call.1} parent=11 // pred_check_branch
          %189 = sbr.rel (%p187) target = $region16
        $region15: #{tpu_custom_call.1} parent=11 // pred_region
          _
        $region16: #{tpu_custom_call.1} parent=11 // pred_fallthru
          _
        // Predicated region
        $region17: #{tpu_custom_call.1} parent=11 // pred_check
          %p190 = pneg %p83
        $region18: #{tpu_custom_call.1} parent=11 // pred_check_branch
          %192 = sbr.rel (%p190) target = $region20
        $region19: #{tpu_custom_call.1} parent=11 // pred_region
          _
        $region20: #{tpu_custom_call.1} parent=11 // pred_fallthru
          _
        // Predicated region
        $region21: #{tpu_custom_call.1} parent=11 // pred_check
          %p193 = pneg %p104
        $region22: #{tpu_custom_call.1} parent=11 // pred_check_branch
          %195 = sbr.rel (%p193) target = $region24
        $region23: #{tpu_custom_call.1} parent=11 // pred_region
          _
        $region24: #{tpu_custom_call.1} parent=11 // pred_fallthru
          _
        // Predicated region
        $region25: #{tpu_custom_call.1} parent=11 // pred_check
          %p196 = pneg %p125
        $region26: #{tpu_custom_call.1} parent=11 // pred_check_branch
          %198 = sbr.rel (%p196) target = $region28
        $region27: #{tpu_custom_call.1} parent=11 // pred_region
          _
        $region28: #{tpu_custom_call.1} parent=11 // pred_fallthru
          _
        // Predicated region
        $region29: #{tpu_custom_call.1} parent=11 // pred_check
          %p199 = pneg %p146
        $region30: #{tpu_custom_call.1} parent=11 // pred_check_branch
          %201 = sbr.rel (%p199) target = $region32
        $region31: #{tpu_custom_call.1} parent=11 // pred_region
          _
        $region32: #{tpu_custom_call.1} parent=11 // pred_fallthru
          _
      $region12: #{tpu_custom_call.1} parent=5 // pred_fallthru
        _
      %p202 = scmp.lt.s32.totalorder %s15, 2
      // Predicated region
      $region33: #{tpu_custom_call.1} parent=5 // pred_check
        %p203 = pneg %p202
      $region34: #{tpu_custom_call.1} parent=5 // pred_check_branch
        %205 = sbr.rel (%p203) target = $region36
      $region35: #{tpu_custom_call.1} parent=5 // pred_region
        // Predicated region
        $region37: #{tpu_custom_call.1} parent=35 // pred_check
          %p206 = pneg %p35
        $region38: #{tpu_custom_call.1} parent=35 // pred_check_branch
          %208 = sbr.rel (%p206) target = $region40
        $region39: #{tpu_custom_call.1} parent=35 // pred_region
          %p209 = scmp.lt.s32.totalorder %s15, 1
          %s210 = scalar_select %p209, %s15, 1
          %s211 = smul.addr %s210, 2
          %s212 = smul.addr %s211, 8
          %s213 = scalar_lea.vmem %s0, %s212
        $region40: #{tpu_custom_call.1} parent=35 // pred_fallthru
          _
      $region36: #{tpu_custom_call.1} parent=5 // pred_fallthru
        _
      %p214 = scmp.le.s32.totalorder 1, %s15
      %p215 = scmp.lt.s32.totalorder %s15, 3
      %p216 = pnand %p214, %p215
      %p217 = pneg %p216
      // Predicated region
      $region41: #{tpu_custom_call.1} parent=5 // pred_check
        _
      $region42: #{tpu_custom_call.1} parent=5 // pred_check_branch
        %219 = sbr.rel (%p216) target = $region44
      $region43: #{tpu_custom_call.1} parent=5 // pred_region
        %s220 = ssub.s32 %s15, 1
        %p221 = scmp.lt.s32.totalorder %s20, 1
        %s222 = scalar_select %p221, %s20, 1
        %s223 = smul.addr %s222, 2
        %s224 = smul.addr %s223, 8
        %s225 = scalar_lea.vmem %s0, %s224
        %p226 = pneg %p41
        %p227 = pneg %p38
        %p228 = pneg %p62
        %p229 = pneg %p59
        %p230 = pneg %p83
        %p231 = pneg %p80
        %p232 = pneg %p104
        %p233 = pneg %p101
        %p234 = pneg %p125
        %p235 = pneg %p122
        %p236 = pneg %p146
        %p237 = pneg %p143
        %p238 = pneg %p172
        %p239 = pneg %p169
        %s240 = sand.u32 %s159, 1
        %s241 = scalar_lea.sflag [#allocation3], %s240
        %s242 = sand.u32 %s159, 1
        %s243 = smul.addr %s242, 16
        %s244 = scalar_lea.vmem [#allocation2], %s243
        %p245 = scmp.lt.s32.totalorder %s20, 1
        %s246 = scalar_select %p245, %s20, 1
        %s247 = smul.addr %s246, 2
        %s248 = smul.addr %s247, 8
        %s249 = scalar_lea.vmem %s0, %s248
        %v250 = vld [vmem:[%s1] sm:$0xff]
        %v251 = vld [vmem:[%s1 + $0x8] sm:$0xff]
        %v252 = vld [vmem:[%s249] sm:$0xff]
        %v253 = vld [vmem:[%s249 + $0x8] sm:$0xff]
        %vm256 = vcmask 1043456
        %v257 = vrot.slane %v252, 4
        %v258 = vrot.slane %v253, 4
        %v259 = vsel %vm256, %v257, %v258
        %v262 = vsel %vm256, 0.0, %v257
        %vm263 = vcmask 1040384
        %v264 = vrot.slane %v252, 7
        %v265 = vrot.slane %v253, 7
        %v266 = vsel %vm263, %v264, %v265
        %v269 = vsel %vm263, 0.0, %v264
        %271 = vset.pattern.permute.xlu0 0
        %272 = vperm.xlu0 %271, %v250
        %v273 = vpop.permute.xlu0 %272
        %276 = vset.pattern.permute.xlu0 0
        %277 = vperm.xlu0 %276, %v251
        %v278 = vpop.permute.xlu0 %277
        %v280 = vmul.f32 %v269, %v273
        %v281 = vmul.f32 %v266, %v278
        %v283 = vrot.slane %v262, 7
        %v284 = vrot.slane %v259, 7
        %v285 = vsel %vm263, %v283, %v284
        %v288 = vsel %vm263, 0.0, %v283
        %v289 = vmul.f32 %v288, %v273
        %v290 = vmul.f32 %v285, %v278
        %293 = vrot.lane.b32.xlu0 %v280, 64
        %v294 = vpop.permute.xlu0 %293
        %295 = vrot.lane.b32.xlu0 %v281, 64
        %v296 = vpop.permute.xlu0 %295
        %301 = vrot.lane.b32.xlu0 %v289, 64
        %v302 = vpop.permute.xlu0 %301
        %303 = vrot.lane.b32.xlu0 %v290, 64
        %v304 = vpop.permute.xlu0 %303
        %vm307 = vcmask 523264
        %v308 = vsel %vm307, %v252, %v294
        %v309 = vsel %vm307, %v253, %v296
        %v310 = vsel %vm307, %v262, %v302
        %v311 = vsel %vm307, %v259, %v304
        %v312 = vld [vmem:[%s2] sm:$0xff]
        %v313 = vld [vmem:[%s2 + $0x8] sm:$0xff]
        %v314 = vld [vmem:[%s2 + $0x10] sm:$0xff]
        %v315 = vld [vmem:[%s2 + $0x18] sm:$0xff]
        %v316 = vld [vmem:[%s2 + $0x20] sm:$0xff]
        %v317 = vld [vmem:[%s2 + $0x28] sm:$0xff]
        %v318 = vld [vmem:[%s2 + $0x30] sm:$0xff]
        %v319 = vld [vmem:[%s2 + $0x38] sm:$0xff]
        %v320 = vld [vmem:[%s2 + $0x40] sm:$0xff]
        %v321 = vld [vmem:[%s2 + $0x48] sm:$0xff]
        %v322 = vld [vmem:[%s2 + $0x50] sm:$0xff]
        %v323 = vld [vmem:[%s2 + $0x58] sm:$0xff]
        %v324 = vld [vmem:[%s2 + $0x60] sm:$0xff]
        %v325 = vld [vmem:[%s2 + $0x68] sm:$0xff]
        %v326 = vld [vmem:[%s2 + $0x70] sm:$0xff]
        %v327 = vld [vmem:[%s2 + $0x78] sm:$0xff]
        %v328 = vld [vmem:[%s2 + $0x80] sm:$0xff]
        %v329 = vld [vmem:[%s2 + $0x88] sm:$0xff]
        %v330 = vld [vmem:[%s2 + $0x90] sm:$0xff]
        %v331 = vld [vmem:[%s2 + $0x98] sm:$0xff]
        %v332 = vld [vmem:[%s2 + $0xa0] sm:$0xff]
        %v333 = vld [vmem:[%s2 + $0xa8] sm:$0xff]
        %v334 = vld [vmem:[%s2 + $0xb0] sm:$0xff]
        %v335 = vld [vmem:[%s2 + $0xb8] sm:$0xff]
        %v336 = vld [vmem:[%s2 + $0xc0] sm:$0xff]
        %v337 = vld [vmem:[%s2 + $0xc8] sm:$0xff]
        %v338 = vld [vmem:[%s2 + $0xd0] sm:$0xff]
        %v339 = vld [vmem:[%s2 + $0xd8] sm:$0xff]
        %v340 = vld [vmem:[%s2 + $0xe0] sm:$0xff]
        %v341 = vld [vmem:[%s2 + $0xe8] sm:$0xff]
        %v342 = vld [vmem:[%s2 + $0xf0] sm:$0xff]
        %v343 = vld [vmem:[%s2 + $0xf8] sm:$0xff]
        %v344 = vld [vmem:[%s3] sm:$0x1]
        %v346 = vlaneseq
        %v347 = vshrl.u32 %v346, 7
        %v348 = vsub.s32 0, %v347
        %v349 = vrot.slane %v344, %v348
        %351 = vmatprep.subr.mxu0 0.0
        %352 = vmatpush1.msra.mxu0 %v327
        %353 = vmatprep.subr.mxu0 0.0
        %354 = vmatpush1.msra.mxu0 %v326
        %355 = vmatprep.subr.mxu0 0.0
        %356 = vmatpush1.msra.mxu0 %v325
        %357 = vmatprep.subr.mxu0 0.0
        %358 = vmatpush1.msra.mxu0 %v324
        %359 = vmatprep.subr.mxu0 0.0
        %360 = vmatpush1.msra.mxu0 %v323
        %361 = vmatprep.subr.mxu0 0.0
        %362 = vmatpush1.msra.mxu0 %v322
        %363 = vmatprep.subr.mxu0 0.0
        %364 = vmatpush1.msra.mxu0 %v321
        %365 = vmatprep.subr.mxu0 0.0
        %366 = vmatpush1.msra.mxu0 %v320
        %367 = vmatprep.subr.mxu0 0.0
        %368 = vmatpush1.msra.mxu0 %v319
        %369 = vmatprep.subr.mxu0 0.0
        %370 = vmatpush1.msra.mxu0 %v318
        %371 = vmatprep.subr.mxu0 0.0
        %372 = vmatpush1.msra.mxu0 %v317
        %373 = vmatprep.subr.mxu0 0.0
        %374 = vmatpush1.msra.mxu0 %v316
        %375 = vmatprep.subr.mxu0 0.0
        %376 = vmatpush1.msra.mxu0 %v315
        %377 = vmatprep.subr.mxu0 0.0
        %378 = vmatpush1.msra.mxu0 %v314
        %379 = vmatprep.subr.mxu0 0.0
        %380 = vmatpush1.msra.mxu0 %v313
        %381 = vmatprep.subr.mxu0 0.0
        %382 = vmatpush1.msra.mxu0 %v312
        %383 = vmatprep.subr.mxu0 0.0
        %384 = vmatpush2.msra.mxu0 %v343
        %385 = vmatprep.subr.mxu0 0.0
        %386 = vmatpush2.msra.mxu0 %v342
        %387 = vmatprep.subr.mxu0 0.0
        %388 = vmatpush2.msra.mxu0 %v341
        %389 = vmatprep.subr.mxu0 0.0
        %390 = vmatpush2.msra.mxu0 %v340
        %391 = vmatprep.subr.mxu0 0.0
        %392 = vmatpush2.msra.mxu0 %v339
        %393 = vmatprep.subr.mxu0 0.0
        %394 = vmatpush2.msra.mxu0 %v338
        %395 = vmatprep.subr.mxu0 0.0
        %396 = vmatpush2.msra.mxu0 %v337
        %397 = vmatprep.subr.mxu0 0.0
        %398 = vmatpush2.msra.mxu0 %v336
        %399 = vmatprep.subr.mxu0 0.0
        %400 = vmatpush2.msra.mxu0 %v335
        %401 = vmatprep.subr.mxu0 0.0
        %402 = vmatpush2.msra.mxu0 %v334
        %403 = vmatprep.subr.mxu0 0.0
        %404 = vmatpush2.msra.mxu0 %v333
        %405 = vmatprep.subr.mxu0 0.0
        %406 = vmatpush2.msra.mxu0 %v332
        %407 = vmatprep.subr.mxu0 0.0
        %408 = vmatpush2.msra.mxu0 %v331
        %409 = vmatprep.subr.mxu0 0.0
        %410 = vmatpush2.msra.mxu0 %v330
        %411 = vmatprep.subr.mxu0 0.0
        %412 = vmatpush2.msra.mxu0 %v329
        %413 = vmatprep.subr.mxu0 0.0
        %414 = vmatpush2.msra.mxu0 %v328
        %415 = vmatprep.mubr.f32.mxu0 %v310
        %416 = vmatmul.mubr.f32.gmra.mxu0 %v308
        %v417 = vpop.f32.mrf.mxu0
        %v418 = vadd.f32 %v349, %v417
        %v419 = vpop.f32.mrf.mxu0
        %420 = vmatprep.mubr.f32.mxu0 %v311
        %421 = vmatmul.mubr.f32.gmra.mxu0 %v309
        %v422 = vpop.f32.mrf.mxu0
        %v423 = vadd.f32 %v349, %v422
        %v424 = vpop.f32.mrf.mxu0
        %425 = vdwg.mxu0
        %v426 = vmul.f32 %v418, 0.70710677
        %v427 = vmul.f32 %v423, 0.70710677
        %v428 = vand.u32 2147483647, %v426
        %v429 = vand.u32 2147483647, %v427
        %v430 = vmul.f32 %v428, 0.3275911
        %v431 = vmul.f32 %v429, 0.3275911
        %v432 = vadd.f32 %v430, 1.0
        %v433 = vadd.f32 %v431, 1.0
        %v434 = vrcp.pop %v432
        %v435 = vmul.f32 1.0, %v434
        %v436 = vrcp.pop %v433
        %v437 = vmul.f32 1.0, %v436
        %v438 = vmul.f32 %v435, 1.0614054
        %v439 = vmul.f32 %v437, 1.0614054
        %v440 = vadd.f32 %v438, -1.4531521
        %v441 = vadd.f32 %v439, -1.4531521
        %v442 = vmul.f32 %v435, %v440
        %v443 = vmul.f32 %v437, %v441
        %v444 = vadd.f32 %v442, 1.4214138
        %v445 = vadd.f32 %v443, 1.4214138
        %v446 = vmul.f32 %v435, %v444
        %v447 = vmul.f32 %v437, %v445
        %v448 = vadd.f32 %v446, -0.28449672
        %v449 = vadd.f32 %v447, -0.28449672
        %v450 = vmul.f32 %v435, %v448
        %v451 = vmul.f32 %v437, %v449
        %v452 = vadd.f32 %v450, 0.2548296
        %v453 = vadd.f32 %v451, 0.2548296
        %v454 = vmul.f32 %v435, %v452
        %v455 = vmul.f32 %v437, %v453
        %v456 = vsub.f32 0.0, %v428
        %v457 = vsub.f32 0.0, %v429
        %v458 = vmul.f32 %v456, %v428
        %v459 = vmul.f32 %v457, %v429
        %v460 = vmul.f32 %v458, 1.442695
        %v461 = vpow.pop %v460
        %v462 = vmul.f32 %v459, 1.442695
        %v463 = vpow.pop %v462
        %v464 = vmul.f32 %v454, %v461
        %v465 = vmul.f32 %v455, %v463
        %v466 = vsub.f32 1.0, %v464
        %v467 = vsub.f32 1.0, %v465
        %vm468 = vcmp.lt.f32.partialorder %v426, 0.0
        %vm469 = vcmp.lt.f32.partialorder %v427, 0.0
        %v470 = vsub.f32 0.0, %v466
        %v471 = vsub.f32 0.0, %v467
        %v472 = vsel %vm468, %v470, %v466
        %v473 = vsel %vm469, %v471, %v467
        %v474 = vmul.f32 %v418, 0.5
        %v475 = vmul.f32 %v423, 0.5
        %v476 = vadd.f32 %v472, 1.0
        %v477 = vadd.f32 %v473, 1.0
        %v478 = vmul.f32 %v474, %v476
        %v479 = vmul.f32 %v475, %v477
        %v482 = vrot.slane %v478, 4
        %v483 = vrot.slane %v479, 4
        %v484 = vsel %vm256, %v482, %v483
        %v487 = vsel %vm256, 0.0, %v482
        %v488 = vrot.slane %v478, 7
        %v489 = vrot.slane %v479, 7
        %v490 = vsel %vm263, %v488, %v489
        %v493 = vsel %vm263, 0.0, %v488
        %v494 = vmul.f32 %v493, %v273
        %v495 = vmul.f32 %v490, %v278
        %v497 = vrot.slane %v487, 7
        %v498 = vrot.slane %v484, 7
        %v499 = vsel %vm263, %v497, %v498
        %v502 = vsel %vm263, 0.0, %v497
        %v503 = vmul.f32 %v502, %v273
        %v504 = vmul.f32 %v499, %v278
        %507 = vrot.lane.b32.xlu0 %v494, 64
        %v508 = vpop.permute.xlu0 %507
        %509 = vrot.lane.b32.xlu0 %v495, 64
        %v510 = vpop.permute.xlu0 %509
        %515 = vrot.lane.b32.xlu0 %v503, 64
        %v516 = vpop.permute.xlu0 %515
        %517 = vrot.lane.b32.xlu0 %v504, 64
        %v518 = vpop.permute.xlu0 %517
        %v521 = vsel %vm307, %v478, %v508
        %v522 = vsel %vm307, %v479, %v510
        %v523 = vsel %vm307, %v487, %v516
        %v524 = vsel %vm307, %v484, %v518
        %v525 = vld [vmem:[%s4] sm:$0xff]
        %v526 = vld [vmem:[%s4 + $0x8] sm:$0xff]
        %v527 = vld [vmem:[%s4 + $0x10] sm:$0xff]
        %v528 = vld [vmem:[%s4 + $0x18] sm:$0xff]
        %v529 = vld [vmem:[%s4 + $0x20] sm:$0xff]
        %v530 = vld [vmem:[%s4 + $0x28] sm:$0xff]
        %v531 = vld [vmem:[%s4 + $0x30] sm:$0xff]
        %v532 = vld [vmem:[%s4 + $0x38] sm:$0xff]
        %v533 = vld [vmem:[%s4 + $0x40] sm:$0xff]
        %v534 = vld [vmem:[%s4 + $0x48] sm:$0xff]
        %v535 = vld [vmem:[%s4 + $0x50] sm:$0xff]
        %v536 = vld [vmem:[%s4 + $0x58] sm:$0xff]
        %v537 = vld [vmem:[%s4 + $0x60] sm:$0xff]
        %v538 = vld [vmem:[%s4 + $0x68] sm:$0xff]
        %v539 = vld [vmem:[%s4 + $0x70] sm:$0xff]
        %v540 = vld [vmem:[%s4 + $0x78] sm:$0xff]
        %v541 = vld [vmem:[%s4 + $0x80] sm:$0xff]
        %v542 = vld [vmem:[%s4 + $0x88] sm:$0xff]
        %v543 = vld [vmem:[%s4 + $0x90] sm:$0xff]
        %v544 = vld [vmem:[%s4 + $0x98] sm:$0xff]
        %v545 = vld [vmem:[%s4 + $0xa0] sm:$0xff]
        %v546 = vld [vmem:[%s4 + $0xa8] sm:$0xff]
        %v547 = vld [vmem:[%s4 + $0xb0] sm:$0xff]
        %v548 = vld [vmem:[%s4 + $0xb8] sm:$0xff]
        %v549 = vld [vmem:[%s4 + $0xc0] sm:$0xff]
        %v550 = vld [vmem:[%s4 + $0xc8] sm:$0xff]
        %v551 = vld [vmem:[%s4 + $0xd0] sm:$0xff]
        %v552 = vld [vmem:[%s4 + $0xd8] sm:$0xff]
        %v553 = vld [vmem:[%s4 + $0xe0] sm:$0xff]
        %v554 = vld [vmem:[%s4 + $0xe8] sm:$0xff]
        %v555 = vld [vmem:[%s4 + $0xf0] sm:$0xff]
        %v556 = vld [vmem:[%s4 + $0xf8] sm:$0xff]
        %v557 = vld [vmem:[%s5] sm:$0x1]
        %v559 = vlaneseq
        %v560 = vshrl.u32 %v559, 7
        %v561 = vsub.s32 0, %v560
        %v562 = vrot.slane %v557, %v561
        %564 = vmatprep.subr.mxu0 0.0
        %565 = vmatpush1.msra.mxu0 %v540
        %566 = vmatprep.subr.mxu0 0.0
        %567 = vmatpush1.msra.mxu0 %v539
        %568 = vmatprep.subr.mxu0 0.0
        %569 = vmatpush1.msra.mxu0 %v538
        %570 = vmatprep.subr.mxu0 0.0
        %571 = vmatpush1.msra.mxu0 %v537
        %572 = vmatprep.subr.mxu0 0.0
        %573 = vmatpush1.msra.mxu0 %v536
        %574 = vmatprep.subr.mxu0 0.0
        %575 = vmatpush1.msra.mxu0 %v535
        %576 = vmatprep.subr.mxu0 0.0
        %577 = vmatpush1.msra.mxu0 %v534
        %578 = vmatprep.subr.mxu0 0.0
        %579 = vmatpush1.msra.mxu0 %v533
        %580 = vmatprep.subr.mxu0 0.0
        %581 = vmatpush1.msra.mxu0 %v532
        %582 = vmatprep.subr.mxu0 0.0
        %583 = vmatpush1.msra.mxu0 %v531
        %584 = vmatprep.subr.mxu0 0.0
        %585 = vmatpush1.msra.mxu0 %v530
        %586 = vmatprep.subr.mxu0 0.0
        %587 = vmatpush1.msra.mxu0 %v529
        %588 = vmatprep.subr.mxu0 0.0
        %589 = vmatpush1.msra.mxu0 %v528
        %590 = vmatprep.subr.mxu0 0.0
        %591 = vmatpush1.msra.mxu0 %v527
        %592 = vmatprep.subr.mxu0 0.0
        %593 = vmatpush1.msra.mxu0 %v526
        %594 = vmatprep.subr.mxu0 0.0
        %595 = vmatpush1.msra.mxu0 %v525
        %596 = vmatprep.subr.mxu0 0.0
        %597 = vmatpush2.msra.mxu0 %v556
        %598 = vmatprep.subr.mxu0 0.0
        %599 = vmatpush2.msra.mxu0 %v555
        %600 = vmatprep.subr.mxu0 0.0
        %601 = vmatpush2.msra.mxu0 %v554
        %602 = vmatprep.subr.mxu0 0.0
        %603 = vmatpush2.msra.mxu0 %v553
        %604 = vmatprep.subr.mxu0 0.0
        %605 = vmatpush2.msra.mxu0 %v552
        %606 = vmatprep.subr.mxu0 0.0
        %607 = vmatpush2.msra.mxu0 %v551
        %608 = vmatprep.subr.mxu0 0.0
        %609 = vmatpush2.msra.mxu0 %v550
        %610 = vmatprep.subr.mxu0 0.0
        %611 = vmatpush2.msra.mxu0 %v549
        %612 = vmatprep.subr.mxu0 0.0
        %613 = vmatpush2.msra.mxu0 %v548
        %614 = vmatprep.subr.mxu0 0.0
        %615 = vmatpush2.msra.mxu0 %v547
        %616 = vmatprep.subr.mxu0 0.0
        %617 = vmatpush2.msra.mxu0 %v546
        %618 = vmatprep.subr.mxu0 0.0
        %619 = vmatpush2.msra.mxu0 %v545
        %620 = vmatprep.subr.mxu0 0.0
        %621 = vmatpush2.msra.mxu0 %v544
        %622 = vmatprep.subr.mxu0 0.0
        %623 = vmatpush2.msra.mxu0 %v543
        %624 = vmatprep.subr.mxu0 0.0
        %625 = vmatpush2.msra.mxu0 %v542
        %626 = vmatprep.subr.mxu0 0.0
        %627 = vmatpush2.msra.mxu0 %v541
        %628 = vmatprep.mubr.f32.mxu0 %v523
        %629 = vmatmul.mubr.f32.gmra.mxu0 %v521
        %v630 = vpop.f32.mrf.mxu0
        %v631 = vadd.f32 %v562, %v630
        %v632 = vpop.f32.mrf.mxu0
        %633 = vmatprep.mubr.f32.mxu0 %v524
        %634 = vmatmul.mubr.f32.gmra.mxu0 %v522
        %v635 = vpop.f32.mrf.mxu0
        %v636 = vadd.f32 %v562, %v635
        %v637 = vpop.f32.mrf.mxu0
        %638 = vdwg.mxu0
        %vm639 = vcmask 261120
        %640 = vst.msk [vmem:[%s244] sm:$0xff] %vm639, %v631
        %641 = vst.msk [vmem:[%s244 + $0x8] sm:$0xff] %vm639, %v636
        %s642 = sand.u32 %s159, 1
        %s643 = scalar_lea.sflag [#allocation3], %s642
        %s644 = sand.u32 %s159, 1
        %s645 = smul.addr %s644, 16
        %s646 = scalar_lea.vmem [#allocation2], %s645
        // Predicated region
        $region45: #{tpu_custom_call.1} parent=43 // pred_check
          %p647 = pneg %p169
        $region46: #{tpu_custom_call.1} parent=43 // pred_check_branch
          %649 = sbr.rel (%p647) target = $region48
        $region47: #{tpu_custom_call.1} parent=43 // pred_region
          %s651 = ssub.s32 256, 256
          %652 = vsyncadd %s643, %s651
          %s653 = smul.addr %s20, 2
          %s654 = smul.addr %s653, 128
          %s655 = scalar_lea.hbm %s6, %s654
          %s656 = sshll.u32 %s646, 4
          %s657 = int_to_ptr.vmem [resolvable:$true] %s656
          %662 = dma.vmem_to_hbm [thread:$0]  %s657, 256, %s655, %s643, 128, 128, 8
        $region48: #{tpu_custom_call.1} parent=43 // pred_fallthru
          _
      $region44: #{tpu_custom_call.1} parent=5 // pred_fallthru
        _
      %p663 = scmp.le.s32.totalorder 2, %s15
      // Predicated region
      $region49: #{tpu_custom_call.1} parent=5 // pred_check
        %p664 = pneg %p663
      $region50: #{tpu_custom_call.1} parent=5 // pred_check_branch
        %666 = sbr.rel (%p664) target = $region52
      $region51: #{tpu_custom_call.1} parent=5 // pred_region
        %s667 = ssub.s32 %s15, 2
        // Predicated region
        $region53: #{tpu_custom_call.1} parent=51 // pred_check
          %p668 = pneg %p175
        $region54: #{tpu_custom_call.1} parent=51 // pred_check_branch
          %670 = sbr.rel (%p668) target = $region56
        $region55: #{tpu_custom_call.1} parent=51 // pred_region
          %s671 = sand.u32 %s160, 1
          %s672 = scalar_lea.sflag [#allocation3], %s671
          %s673 = sand.u32 %s160, 1
          %s674 = smul.addr %s673, 16
          %s675 = scalar_lea.vmem [#allocation2], %s674
          %676 = dma.done %s672, 256
        $region56: #{tpu_custom_call.1} parent=51 // pred_fallthru
          _
      $region52: #{tpu_custom_call.1} parent=5 // pred_fallthru
        _
    $region6: #{tpu_custom_call.1} parent=1 // loop_footer
      %s19 = sadd.s32 1, %s15
    $region7: #{tpu_custom_call.1} parent=1 // loop_footer_branch
      %14 = sbr.rel target = $region3
    $region8: #{tpu_custom_call.1} parent=1 // loop_exit
      _
    %677 = vsyncpa [#allocation3], 1
    %s678 = scalar_lea.sflag [#allocation3], 1
    %679 = vsyncpa %s678, 1

</llo_original>
